<compile_context>
chip_gen: v5e
topology: v5e:2x2
jax: 0.10.0
libtpu: 0.0.40
codegen_flags: <defaults>
</compile_context>

<pallas_src>
import functools

import jax
import jax.numpy as jnp
from jax.experimental import pallas as pl
from jax.experimental.pallas import tpu as pltpu


def _round_up(x, m):
    return ((x + m - 1) // m) * m


def _fcc_kernel(x_ref, w1_ref, b1_ref, w2_ref, b2_ref, w3_ref, b3_ref,
                out_ref, *, nc):
    """3-layer MLP: (Linear+ReLU) x2, Linear, tanh on the 'scale' lanes."""
    mxu_dtype = w1_ref.dtype          # bf16 in mixed-precision mode, else f32
    x = x_ref[...].astype(mxu_dtype)

    # Layer 1: Linear(nc -> Hp) + ReLU   (bias add / ReLU in f32)
    h1 = jnp.dot(x, w1_ref[...], preferred_element_type=jnp.float32)
    h1 = jnp.maximum(h1 + b1_ref[...], 0.0)

    # Layer 2: Linear(Hp -> Hp) + ReLU
    h2 = jnp.dot(h1.astype(mxu_dtype), w2_ref[...],
                 preferred_element_type=jnp.float32)
    h2 = jnp.maximum(h2 + b2_ref[...], 0.0)

    # Layer 3: Linear(Hp -> Op)
    pars = jnp.dot(h2.astype(mxu_dtype), w3_ref[...],
                   preferred_element_type=jnp.float32) + b3_ref[...]

    # Lane-dense epilogue: tanh on lanes [nc, 2*nc), identity on [0, nc).
    # Lanes >= 2*nc are zero padding (tanh(0)=0) and get sliced off outside.
    lane = jax.lax.broadcasted_iota(jnp.int32, pars.shape, dimension=1)
    out = jnp.where(lane >= nc, jnp.tanh(pars), pars)
    out_ref[...] = out.astype(out_ref.dtype)


def fcc_forward(value, params, *, use_bf16=False, tb_max=512):
    """value: [B, nc] float32. params: dict w1,b1,w2,b2,w3,b3 (Linear layout:
    w is (in_features, out_features), b is (out_features,))."""
    B, nc = value.shape
    w1, b1 = params["w1"], params["b1"]
    w2, b2 = params["w2"], params["b2"]
    w3, b3 = params["w3"], params["b3"]
    H = w1.shape[1]

    # Pad hidden / output feature dims to 128 lanes (exact: zero pads).
    Hp = _round_up(H, 128)
    Op = _round_up(2 * nc, 128)
    w1p = jnp.pad(w1, ((0, 0), (0, Hp - H)))
    b1p = jnp.pad(b1.reshape(1, -1), ((0, 0), (0, Hp - H)))
    w2p = jnp.pad(w2, ((0, Hp - H), (0, Hp - H)))
    b2p = jnp.pad(b2.reshape(1, -1), ((0, 0), (0, Hp - H)))
    w3p = jnp.pad(w3, ((0, Hp - H), (0, Op - 2 * nc)))
    b3p = jnp.pad(b3.reshape(1, -1), ((0, 0), (0, Op - 2 * nc)))

    if use_bf16:
        # MXU operands in bf16 (v6e/v7x); biases / elementwise stay f32.
        w1p, w2p, w3p = (w.astype(jnp.bfloat16) for w in (w1p, w2p, w3p))

    # Batch tiling: TB rows per grid step, weights stay VMEM-resident.
    TB = min(_round_up(B, 8), tb_max)
    Bp = _round_up(B, TB)
    xp = value if Bp == B else jnp.pad(value, ((0, Bp - B), (0, 0)))
    grid = (Bp // TB,)

    const = lambda shape: pl.BlockSpec(shape, lambda i: (0,) * len(shape))

    out = pl.pallas_call(
        functools.partial(_fcc_kernel, nc=nc),
        out_shape=jax.ShapeDtypeStruct((Bp, Op), value.dtype),
        grid=grid,
        in_specs=[
            pl.BlockSpec((TB, nc), lambda i: (i, 0)),     # x tile
            const((nc, Hp)), const((1, Hp)),              # w1, b1 (resident)
            const((Hp, Hp)), const((1, Hp)),              # w2, b2 (resident)
            const((Hp, Op)), const((1, Op)),              # w3, b3 (resident)
        ],
        out_specs=pl.BlockSpec((TB, Op), lambda i: (i, 0)),
        compiler_params=pltpu.CompilerParams(
            dimension_semantics=("parallel",)),           # both TCs on v7x
    )(xp, w1p, b1p, w2p, b2p, w3p, b3p)

    out = out[:B]
    translation = out[:, :nc]
    scale = out[:, nc:2 * nc]
    return translation, scale


def init_fcc_params(key, nc, n_hidden=128, n_layers=3, dtype=jnp.float32):
    """PyTorch-style init (uniform +-1/sqrt(fan_in)) for FCC with 3 layers."""
    assert n_layers == 3  # structure below hard-codes 3 layers, like the test
    ks = jax.random.split(key, 6)

    def lin(kw, kb, fan_in, fan_out):
        bound = 1.0 / jnp.sqrt(jnp.asarray(fan_in, dtype))
        w = jax.random.uniform(kw, (fan_in, fan_out), dtype, -bound, bound)
        b = jax.random.uniform(kb, (fan_out,), dtype, -bound, bound)
        return w, b

    w1, b1 = lin(ks[0], ks[1], nc, n_hidden)
    w2, b2 = lin(ks[2], ks[3], n_hidden, n_hidden)
    w3, b3 = lin(ks[4], ks[5], n_hidden, 2 * nc)
    return {"w1": w1, "b1": b1, "w2": w2, "b2": b2, "w3": w3, "b3": b3}


def fcc_reference(value, params):
    """Pure-JAX reference of the PyTorch forward for validation."""
    h = jnp.maximum(value @ params["w1"] + params["b1"], 0.0)
    h = jnp.maximum(h @ params["w2"] + params["b2"], 0.0)
    pars = h @ params["w3"] + params["b3"]
    nc = value.shape[1]
    return pars[:, :nc], jnp.tanh(pars[:, nc:])


if __name__ == "__main__":
    key = jax.random.PRNGKey(0)
    k_param, k_x = jax.random.split(key)

    B, nc, n_hidden = 8, 4, 32
    params = init_fcc_params(k_param, nc, n_hidden=n_hidden, n_layers=3)
    value = jax.random.normal(k_x, (B, nc), dtype=jnp.float32)

    t_ref, s_ref = fcc_reference(value, params)

    # Full-precision path: bit-tight check against the reference.
    translation, scale = fcc_forward(value, params, use_bf16=False)
    jax.block_until_ready((translation, scale))
    assert translation.shape == (B, nc) and scale.shape == (B, nc)
    assert jnp.allclose(translation, t_ref, atol=1e-5, rtol=1e-5)
    assert jnp.allclose(scale, s_ref, atol=1e-5, rtol=1e-5)

    # Mixed-precision (bf16 MXU operands) path: loose check.
    t_bf, s_bf = fcc_forward(value, params, use_bf16=True)
    jax.block_until_ready((t_bf, s_bf))
    assert jnp.allclose(t_bf, t_ref, atol=1e-1, rtol=1e-1)
    assert jnp.allclose(s_bf, s_ref, atol=1e-1, rtol=1e-1)

    print("KERNEL_OK")
</pallas_src>

<mosaic_0001>
module attributes {stable_mosaic.version = 11 : i64} {
  func.func @_fcc_kernel(%arg0: i32, %arg1: memref<8x4xf32, #tpu.memory_space<vmem>>, %arg2: memref<4x128xf32, #tpu.memory_space<vmem>>, %arg3: memref<1x128xf32, #tpu.memory_space<vmem>>, %arg4: memref<128x128xf32, #tpu.memory_space<vmem>>, %arg5: memref<1x128xf32, #tpu.memory_space<vmem>>, %arg6: memref<128x128xf32, #tpu.memory_space<vmem>>, %arg7: memref<1x128xf32, #tpu.memory_space<vmem>>, %arg8: memref<8x128xf32, #tpu.memory_space<vmem>>) attributes {dimension_semantics = [#tpu.dimension_semantics<parallel>], iteration_bounds = array<i64: 1>, scalar_prefetch = 0 : i64, scratch_operands = 0 : i64, tpu.core_type = #tpu.core_type<tc>, window_params = [{transform_indices = @transform_0, window_bounds = array<i64: 8, 4>}, {pipeline_mode = #tpu.pipeline_mode<synchronous>, transform_indices = @transform_1, window_bounds = array<i64: 4, 128>}, {pipeline_mode = #tpu.pipeline_mode<synchronous>, transform_indices = @transform_2, window_bounds = array<i64: 1, 128>}, {pipeline_mode = #tpu.pipeline_mode<synchronous>, transform_indices = @transform_3, window_bounds = array<i64: 128, 128>}, {pipeline_mode = #tpu.pipeline_mode<synchronous>, transform_indices = @transform_4, window_bounds = array<i64: 1, 128>}, {pipeline_mode = #tpu.pipeline_mode<synchronous>, transform_indices = @transform_5, window_bounds = array<i64: 128, 128>}, {pipeline_mode = #tpu.pipeline_mode<synchronous>, transform_indices = @transform_6, window_bounds = array<i64: 1, 128>}, {transform_indices = @transform_7, window_bounds = array<i64: 8, 128>}]} {
    %c0 = arith.constant 0 : index
    %c0_0 = arith.constant 0 : index
    %0 = vector.load %arg1[%c0, %c0_0] : memref<8x4xf32, #tpu.memory_space<vmem>>, vector<8x4xf32>
    %c0_1 = arith.constant 0 : index
    %c0_2 = arith.constant 0 : index
    %1 = vector.load %arg2[%c0_1, %c0_2] : memref<4x128xf32, #tpu.memory_space<vmem>>, vector<4x128xf32>
    %cst = arith.constant dense<0.000000e+00> : vector<8x128xf32>
    %2 = tpu.matmul %0, %1, %cst {dimension_numbers = #tpu.dot_dimension_numbers<[1], [0], [0], [1], [0, 0, 1, 1], [], []>} : vector<8x4xf32>, vector<4x128xf32>, vector<8x128xf32> -> vector<8x128xf32>
    %c0_3 = arith.constant 0 : index
    %c0_4 = arith.constant 0 : index
    %3 = vector.load %arg3[%c0_3, %c0_4] : memref<1x128xf32, #tpu.memory_space<vmem>>, vector<1x128xf32>
    %4 = vector.broadcast %3 : vector<1x128xf32> to vector<8x128xf32>
    %5 = arith.addf %2, %4 : vector<8x128xf32>
    %cst_5 = arith.constant 0.000000e+00 : f32
    %6 = vector.broadcast %cst_5 : f32 to vector<8x128xf32>
    %7 = arith.maximumf %5, %6 : vector<8x128xf32>
    %c0_6 = arith.constant 0 : index
    %c0_7 = arith.constant 0 : index
    %8 = vector.load %arg4[%c0_6, %c0_7] : memref<128x128xf32, #tpu.memory_space<vmem>>, vector<128x128xf32>
    %cst_8 = arith.constant dense<0.000000e+00> : vector<8x128xf32>
    %9 = tpu.matmul %7, %8, %cst_8 {dimension_numbers = #tpu.dot_dimension_numbers<[1], [0], [0], [1], [0, 0, 1, 1], [], []>} : vector<8x128xf32>, vector<128x128xf32>, vector<8x128xf32> -> vector<8x128xf32>
    %c0_9 = arith.constant 0 : index
    %c0_10 = arith.constant 0 : index
    %10 = vector.load %arg5[%c0_9, %c0_10] : memref<1x128xf32, #tpu.memory_space<vmem>>, vector<1x128xf32>
    %11 = vector.broadcast %10 : vector<1x128xf32> to vector<8x128xf32>
    %12 = arith.addf %9, %11 : vector<8x128xf32>
    %cst_11 = arith.constant 0.000000e+00 : f32
    %13 = vector.broadcast %cst_11 : f32 to vector<8x128xf32>
    %14 = arith.maximumf %12, %13 : vector<8x128xf32>
    %c0_12 = arith.constant 0 : index
    %c0_13 = arith.constant 0 : index
    %15 = vector.load %arg6[%c0_12, %c0_13] : memref<128x128xf32, #tpu.memory_space<vmem>>, vector<128x128xf32>
    %cst_14 = arith.constant dense<0.000000e+00> : vector<8x128xf32>
    %16 = tpu.matmul %14, %15, %cst_14 {dimension_numbers = #tpu.dot_dimension_numbers<[1], [0], [0], [1], [0, 0, 1, 1], [], []>} : vector<8x128xf32>, vector<128x128xf32>, vector<8x128xf32> -> vector<8x128xf32>
    %c0_15 = arith.constant 0 : index
    %c0_16 = arith.constant 0 : index
    %17 = vector.load %arg7[%c0_15, %c0_16] : memref<1x128xf32, #tpu.memory_space<vmem>>, vector<1x128xf32>
    %18 = vector.broadcast %17 : vector<1x128xf32> to vector<8x128xf32>
    %19 = arith.addf %16, %18 : vector<8x128xf32>
    %20 = tpu.iota {dimensions = array<i32: 1>} : vector<8x128xi32>
    %c4_i32 = arith.constant 4 : i32
    %21 = vector.broadcast %c4_i32 : i32 to vector<8x128xi32>
    %22 = arith.cmpi sge, %20, %21 : vector<8x128xi32>
    %23 = math.tanh %19 : vector<8x128xf32>
    %24 = arith.select %22, %23, %19 : vector<8x128xi1>, vector<8x128xf32>
    %c0_17 = arith.constant 0 : index
    %c0_18 = arith.constant 0 : index
    %25 = vector.load %arg8[%c0_17, %c0_18] : memref<8x128xf32, #tpu.memory_space<vmem>>, vector<8x128xf32>
    tpu.vector_store %arg8[%c0_17, %c0_18], %24 {strides = array<i32>} : memref<8x128xf32, #tpu.memory_space<vmem>>, vector<8x128xf32>,
    return
  }
  func.func @transform_0(%arg0: i32) -> (i32, i32) {
    %c0_i32 = arith.constant 0 : i32
    %c0_i32_0 = arith.constant 0 : i32
    return %arg0, %c0_i32 : i32, i32
  }
  func.func @transform_1(%arg0: i32) -> (i32, i32) {
    %c0_i32 = arith.constant 0 : i32
    %c0_i32_0 = arith.constant 0 : i32
    %c0_i32_1 = arith.constant 0 : i32
    return %c0_i32, %c0_i32_0 : i32, i32
  }
  func.func @transform_2(%arg0: i32) -> (i32, i32) {
    %c0_i32 = arith.constant 0 : i32
    %c0_i32_0 = arith.constant 0 : i32
    %c0_i32_1 = arith.constant 0 : i32
    return %c0_i32, %c0_i32_0 : i32, i32
  }
  func.func @transform_3(%arg0: i32) -> (i32, i32) {
    %c0_i32 = arith.constant 0 : i32
    %c0_i32_0 = arith.constant 0 : i32
    %c0_i32_1 = arith.constant 0 : i32
    return %c0_i32, %c0_i32_0 : i32, i32
  }
  func.func @transform_4(%arg0: i32) -> (i32, i32) {
    %c0_i32 = arith.constant 0 : i32
    %c0_i32_0 = arith.constant 0 : i32
    %c0_i32_1 = arith.constant 0 : i32
    return %c0_i32, %c0_i32_0 : i32, i32
  }
  func.func @transform_5(%arg0: i32) -> (i32, i32) {
    %c0_i32 = arith.constant 0 : i32
    %c0_i32_0 = arith.constant 0 : i32
    %c0_i32_1 = arith.constant 0 : i32
    return %c0_i32, %c0_i32_0 : i32, i32
  }
  func.func @transform_6(%arg0: i32) -> (i32, i32) {
    %c0_i32 = arith.constant 0 : i32
    %c0_i32_0 = arith.constant 0 : i32
    %c0_i32_1 = arith.constant 0 : i32
    return %c0_i32, %c0_i32_0 : i32, i32
  }
  func.func @transform_7(%arg0: i32) -> (i32, i32) {
    %c0_i32 = arith.constant 0 : i32
    %c0_i32_0 = arith.constant 0 : i32
    return %arg0, %c0_i32 : i32, i32
  }
}

</mosaic_0001>

<llo_original>
// kernel: tpu_custom_call.1
$region0: #{tpu_custom_call.1}
  #allocation0 [shape = 'u32[]', space=smem, size = 0x4, offset = 0x4, fixed_abs, tag = 'smem constant byte address 0x4 - core index']
  #allocation1 [shape = 'u32[72,128]{1,0:T(1,128)}', space=vmem, size = 0x9000, scoped, tag = 'internal scratch']
  %s0 = inlined_call_operand.vmem [shape: f32[8,4], index: 0, kind: input, shape index: {}]
  %s1 = inlined_call_operand.vmem [shape: f32[4,128], index: 1, kind: input, shape index: {}]
  %s2 = inlined_call_operand.vmem [shape: f32[1,128], index: 2, kind: input, shape index: {}]
  %s3 = inlined_call_operand.hbm [shape: f32[128,128], index: 3, kind: input, shape index: {}]
  %s4 = inlined_call_operand.vmem [shape: f32[1,128], index: 4, kind: input, shape index: {}]
  %s5 = inlined_call_operand.hbm [shape: f32[128,128], index: 5, kind: input, shape index: {}]
  %s6 = inlined_call_operand.vmem [shape: f32[1,128], index: 6, kind: input, shape index: {}]
  %s7 = inlined_call_operand.hbm [shape: f32[8,128], index: 7, kind: output, shape index: {}]
  %s8 = sld [smem:[#allocation0]]
  $region46: #{tpu_custom_call.1} parent=0
    _
  %s10 = ssub.s32 1, %s8
  %s11 = scalar_select 0, %s10, %s8
  $region1: #{tpu_custom_call.1} parent=0
    #allocation2 [shape = 'u8[65536]{0}', space=vmem, size = 0x10000, scoped, tag = 'input window, operand 3, single buffered']
    #allocation3 [shape = 's32[1]{0}', space=sflag, size = 0x4, scoped, tag = 'scoped memory for tpu_custom_call.1']
    #allocation4 [shape = 's32[1]{0}', space=sflag, size = 0x4, scoped, tag = 'scoped memory for tpu_custom_call.1']
    #allocation5 [shape = 'u8[65536]{0}', space=vmem, size = 0x10000, scoped, tag = 'input window, operand 5, single buffered']
    #allocation6 [shape = 's32[1]{0}', space=sflag, size = 0x4, scoped, tag = 'scoped memory for tpu_custom_call.1']
    #allocation7 [shape = 'u8[4096]{0}', space=vmem, size = 0x1000, scoped, tag = 'output window, operand 0, single buffered']
    %12 = vsyncpa [#allocation3], 0
    %13 = vsyncpa [#allocation6], 0
    %14 = vsyncpa [#allocation4], 0
    // Predicated region
    $region2: #{tpu_custom_call.1} parent=1 // pred_check
      _
    $region3: #{tpu_custom_call.1} parent=1 // pred_check_branch
      %16 = sbr.rel (0) target = $region5
    $region4: #{tpu_custom_call.1} parent=1 // pred_region
      _
    $region5: #{tpu_custom_call.1} parent=1 // pred_fallthru
      _
    // Predicated region
    $region6: #{tpu_custom_call.1} parent=1 // pred_check
      _
    $region7: #{tpu_custom_call.1} parent=1 // pred_check_branch
      %18 = sbr.rel (0) target = $region9
    $region8: #{tpu_custom_call.1} parent=1 // pred_region
      _
    $region9: #{tpu_custom_call.1} parent=1 // pred_fallthru
      _
    // Predicated region
    $region10: #{tpu_custom_call.1} parent=1 // pred_check
      _
    $region11: #{tpu_custom_call.1} parent=1 // pred_check_branch
      %20 = sbr.rel (0) target = $region13
    $region12: #{tpu_custom_call.1} parent=1 // pred_region
      _
    $region13: #{tpu_custom_call.1} parent=1 // pred_fallthru
      _
    // Predicated region
    $region14: #{tpu_custom_call.1} parent=1 // pred_check
      _
    $region15: #{tpu_custom_call.1} parent=1 // pred_check_branch
      %22 = sbr.rel (0) target = $region17
    $region16: #{tpu_custom_call.1} parent=1 // pred_region
      %24 = vsyncadd [#allocation3], 0
      %s25 = sshll.u32 %s3, 4
      %s26 = int_to_ptr.hbm [resolvable:$true] %s25
      %s27 = sshll.u32 [#allocation2], 4
      %s28 = int_to_ptr.vmem [resolvable:$true] %s27
      %33 = dma.hbm_to_vmem [thread:$0]  %s26, 2048, %s28, [#allocation3], 128, 128, 8
    $region17: #{tpu_custom_call.1} parent=1 // pred_fallthru
      _
    // Predicated region
    $region18: #{tpu_custom_call.1} parent=1 // pred_check
      _
    $region19: #{tpu_custom_call.1} parent=1 // pred_check_branch
      %35 = sbr.rel (0) target = $region21
    $region20: #{tpu_custom_call.1} parent=1 // pred_region
      _
    $region21: #{tpu_custom_call.1} parent=1 // pred_fallthru
      _
    // Predicated region
    $region22: #{tpu_custom_call.1} parent=1 // pred_check
      _
    $region23: #{tpu_custom_call.1} parent=1 // pred_check_branch
      %37 = sbr.rel (0) target = $region25
    $region24: #{tpu_custom_call.1} parent=1 // pred_region
      %39 = vsyncadd [#allocation6], 0
      %s40 = sshll.u32 %s5, 4
      %s41 = int_to_ptr.hbm [resolvable:$true] %s40
      %s42 = sshll.u32 [#allocation5], 4
      %s43 = int_to_ptr.vmem [resolvable:$true] %s42
      %48 = dma.hbm_to_vmem [thread:$0]  %s41, 2048, %s43, [#allocation6], 128, 128, 8
    $region25: #{tpu_custom_call.1} parent=1 // pred_fallthru
      _
    // Predicated region
    $region26: #{tpu_custom_call.1} parent=1 // pred_check
      _
    $region27: #{tpu_custom_call.1} parent=1 // pred_check_branch
      %50 = sbr.rel (0) target = $region29
    $region28: #{tpu_custom_call.1} parent=1 // pred_region
      _
    $region29: #{tpu_custom_call.1} parent=1 // pred_fallthru
      _
    // Predicated region
    $region30: #{tpu_custom_call.1} parent=1 // pred_check
      _
    $region31: #{tpu_custom_call.1} parent=1 // pred_check_branch
      %52 = sbr.rel (0) target = $region33
    $region32: #{tpu_custom_call.1} parent=1 // pred_region
      %54 = dma.done [#allocation3], 2048
    $region33: #{tpu_custom_call.1} parent=1 // pred_fallthru
      _
    // Predicated region
    $region34: #{tpu_custom_call.1} parent=1 // pred_check
      _
    $region35: #{tpu_custom_call.1} parent=1 // pred_check_branch
      %56 = sbr.rel (0) target = $region37
    $region36: #{tpu_custom_call.1} parent=1 // pred_region
      %58 = dma.done [#allocation6], 2048
    $region37: #{tpu_custom_call.1} parent=1 // pred_fallthru
      _
    %v59 = vld [vmem:[%s0] sm:$0xff]
    %v60 = vld [vmem:[%s1] sm:$0xf]
    %v61 = vld [vmem:[%s2] sm:$0x1]
    %v63 = vperm.slane %v61, 0
    %vm65 = vcmask 31744
    %v67 = vsel %vm65, %v59, 0
    %vm69 = vcmask 1043456
    %v71 = vsel %vm69, %v60, 0
    %73 = vmatpush.msra.mxu0 0.0
    %74 = vmatpush.msra.mxu0 0.0
    %75 = vmatpush.msra.mxu0 0.0
    %76 = vmatpush.msra.mxu0 0.0
    %77 = vmatpush.msra.mxu0 0.0
    %78 = vmatpush.msra.mxu0 0.0
    %79 = vmatpush.msra.mxu0 0.0
    %80 = vmatpush.msra.mxu0 0.0
    %81 = vmatpush.msra.mxu0 0.0
    %82 = vmatpush.msra.mxu0 0.0
    %83 = vmatpush.msra.mxu0 0.0
    %84 = vmatpush.msra.mxu0 0.0
    %85 = vmatpush.msra.mxu0 0.0
    %86 = vmatpush.msra.mxu0 0.0
    %87 = vmatpush.msra.mxu0 0.0
    %88 = vmatpush.msra.mxu0 %v71
    %89 = vmatmul.f32.gmra.mxu0 %v67
    %v90 = vpop.f32.mrf.mxu0
    %v91 = vadd.f32 %v63, %v90
    %92 = vdwg.mxu0
    %v93 = vmax.f32 %v91, 0.0
    %v94 = vld [vmem:[#allocation2] sm:$0xff]
    %v95 = vld [vmem:[#allocation2 + $0x8] sm:$0xff]
    %v96 = vld [vmem:[#allocation2 + $0x10] sm:$0xff]
    %v97 = vld [vmem:[#allocation2 + $0x18] sm:$0xff]
    %v98 = vld [vmem:[#allocation2 + $0x20] sm:$0xff]
    %v99 = vld [vmem:[#allocation2 + $0x28] sm:$0xff]
    %v100 = vld [vmem:[#allocation2 + $0x30] sm:$0xff]
    %v101 = vld [vmem:[#allocation2 + $0x38] sm:$0xff]
    %v102 = vld [vmem:[#allocation2 + $0x40] sm:$0xff]
    %v103 = vld [vmem:[#allocation2 + $0x48] sm:$0xff]
    %v104 = vld [vmem:[#allocation2 + $0x50] sm:$0xff]
    %v105 = vld [vmem:[#allocation2 + $0x58] sm:$0xff]
    %v106 = vld [vmem:[#allocation2 + $0x60] sm:$0xff]
    %v107 = vld [vmem:[#allocation2 + $0x68] sm:$0xff]
    %v108 = vld [vmem:[#allocation2 + $0x70] sm:$0xff]
    %v109 = vld [vmem:[#allocation2 + $0x78] sm:$0xff]
    %v110 = vld [vmem:[%s4] sm:$0x1]
    %v112 = vperm.slane %v110, 0
    %114 = vmatpush.msra.mxu0 %v109
    %115 = vmatpush.msra.mxu0 %v108
    %116 = vmatpush.msra.mxu0 %v107
    %117 = vmatpush.msra.mxu0 %v106
    %118 = vmatpush.msra.mxu0 %v105
    %119 = vmatpush.msra.mxu0 %v104
    %120 = vmatpush.msra.mxu0 %v103
    %121 = vmatpush.msra.mxu0 %v102
    %122 = vmatpush.msra.mxu0 %v101
    %123 = vmatpush.msra.mxu0 %v100
    %124 = vmatpush.msra.mxu0 %v99
    %125 = vmatpush.msra.mxu0 %v98
    %126 = vmatpush.msra.mxu0 %v97
    %127 = vmatpush.msra.mxu0 %v96
    %128 = vmatpush.msra.mxu0 %v95
    %129 = vmatpush.msra.mxu0 %v94
    %130 = vmatmul.f32.gmra.mxu0 %v93
    %v131 = vpop.f32.mrf.mxu0
    %v132 = vadd.f32 %v112, %v131
    %133 = vdwg.mxu0
    %v134 = vmax.f32 %v132, 0.0
    %v135 = vld [vmem:[#allocation5] sm:$0xff]
    %v136 = vld [vmem:[#allocation5 + $0x8] sm:$0xff]
    %v137 = vld [vmem:[#allocation5 + $0x10] sm:$0xff]
    %v138 = vld [vmem:[#allocation5 + $0x18] sm:$0xff]
    %v139 = vld [vmem:[#allocation5 + $0x20] sm:$0xff]
    %v140 = vld [vmem:[#allocation5 + $0x28] sm:$0xff]
    %v141 = vld [vmem:[#allocation5 + $0x30] sm:$0xff]
    %v142 = vld [vmem:[#allocation5 + $0x38] sm:$0xff]
    %v143 = vld [vmem:[#allocation5 + $0x40] sm:$0xff]
    %v144 = vld [vmem:[#allocation5 + $0x48] sm:$0xff]
    %v145 = vld [vmem:[#allocation5 + $0x50] sm:$0xff]
    %v146 = vld [vmem:[#allocation5 + $0x58] sm:$0xff]
    %v147 = vld [vmem:[#allocation5 + $0x60] sm:$0xff]
    %v148 = vld [vmem:[#allocation5 + $0x68] sm:$0xff]
    %v149 = vld [vmem:[#allocation5 + $0x70] sm:$0xff]
    %v150 = vld [vmem:[#allocation5 + $0x78] sm:$0xff]
    %v151 = vld [vmem:[%s6] sm:$0x1]
    %v153 = vperm.slane %v151, 0
    %155 = vmatpush.msra.mxu0 %v150
    %156 = vmatpush.msra.mxu0 %v149
    %157 = vmatpush.msra.mxu0 %v148
    %158 = vmatpush.msra.mxu0 %v147
    %159 = vmatpush.msra.mxu0 %v146
    %160 = vmatpush.msra.mxu0 %v145
    %161 = vmatpush.msra.mxu0 %v144
    %162 = vmatpush.msra.mxu0 %v143
    %163 = vmatpush.msra.mxu0 %v142
    %164 = vmatpush.msra.mxu0 %v141
    %165 = vmatpush.msra.mxu0 %v140
    %166 = vmatpush.msra.mxu0 %v139
    %167 = vmatpush.msra.mxu0 %v138
    %168 = vmatpush.msra.mxu0 %v137
    %169 = vmatpush.msra.mxu0 %v136
    %170 = vmatpush.msra.mxu0 %v135
    %171 = vmatmul.f32.gmra.mxu0 %v134
    %v172 = vpop.f32.mrf.mxu0
    %v173 = vadd.f32 %v153, %v172
    %174 = vdwg.mxu0
    %v175 = vlaneseq
    %v176 = vand.u32 %v175, 127
    %vm177 = vcmp.ge.s32.totalorder %v176, 4
    %v178 = vtanh.pop %v173
    %v179 = vsel %vm177, %v178, %v173
    %180 = vst [vmem:[#allocation7] sm:$0xff] %v179
    // Predicated region
    $region38: #{tpu_custom_call.1} parent=1 // pred_check
      _
    $region39: #{tpu_custom_call.1} parent=1 // pred_check_branch
      %182 = sbr.rel (0) target = $region41
    $region40: #{tpu_custom_call.1} parent=1 // pred_region
      %184 = vsyncadd [#allocation4], 0
      %s186 = sshll.u32 [#allocation7], 4
      %s187 = int_to_ptr.vmem [resolvable:$true] %s186
      %s188 = sshll.u32 %s7, 4
      %s189 = int_to_ptr.hbm [resolvable:$true] %s188
      %191 = dma.vmem_to_hbm [thread:$0]  %s187, 128, %s189, [#allocation4]
    $region41: #{tpu_custom_call.1} parent=1 // pred_fallthru
      _
    // Predicated region
    $region42: #{tpu_custom_call.1} parent=1 // pred_check
      _
    $region43: #{tpu_custom_call.1} parent=1 // pred_check_branch
      %193 = sbr.rel (0) target = $region45
    $region44: #{tpu_custom_call.1} parent=1 // pred_region
      %195 = dma.done [#allocation4], 128
    $region45: #{tpu_custom_call.1} parent=1 // pred_fallthru
      _
    %196 = vsyncpa [#allocation3], 1
    %197 = vsyncpa [#allocation6], 1
    %198 = vsyncpa [#allocation4], 1

</llo_original>
